<compile_context>
chip_gen: v6e
topology: v6e:2x2x1
jax: 0.10.0
libtpu: 0.0.40
codegen_flags: <defaults>
</compile_context>

<pallas_src>
import functools

import jax
import jax.numpy as jnp
from jax.experimental import pallas as pl
from jax.experimental.pallas import tpu as pltpu


def polyfit_kernel(w_ref, x_ref, y_ref, *, ncoef):
    """Horner evaluation of y = sum_i w[i] * x**i on one (BR, LANES) tile.

    w_ref: SMEM (ncoef,) f32 (scalar-prefetched, read as scalars)
    x_ref / y_ref: VMEM (BR, LANES) f32 tiles
    """
    x = x_ref[...]
    if ncoef == 1:
        y = jnp.zeros_like(x) + w_ref[0]
    else:
        # Folded Horner init: skip the zeros tile and one full-tile add.
        y = x * w_ref[ncoef - 1] + w_ref[ncoef - 2]
        for i in range(ncoef - 3, -1, -1):
            y = y * x + w_ref[i]
    y_ref[...] = y.astype(y_ref.dtype)


# ~4 MiB f32 blocks: >=85% of HBM roofline on v5e/v6e and amortizes the
# ~0.35us/grid-step overhead on v7x's 3.2 TB/s path (block moves in ~1.3us+).
_TARGET_BLOCK_BYTES = 4 << 20
# x + y double-buffered at 4 MiB blocks = 16 MiB; 32 MiB leaves headroom and is
# safe on every generation (v5e/v6e 128 MiB physical, v7x 64 MiB physical /
# 32 MiB default scoped).
_VMEM_LIMIT_BYTES = 32 << 20


def polyfit(x, w):
    """Evaluate y = sum_i w[i] * x**i elementwise; same shape/dtype as x."""
    ncoef = int(w.shape[0])
    n = int(x.shape[0])
    if ncoef == 0:
        return jnp.zeros_like(x)

    itemsize = jnp.dtype(x.dtype).itemsize
    sublanes = 8
    # Lane-dense 2-D slab: wide last dim as soon as the input is big enough to
    # benefit (unmasked full-width vst + long contiguous DMA bursts); narrow
    # lanes for tiny demo inputs so padding stays negligible.
    lanes = 1024 if n >= (1 << 14) else 128
    chunk = lanes * sublanes

    # Block rows sized by bytes (~4 MiB per block), multiple of 8.
    br = max(sublanes,
             (_TARGET_BLOCK_BYTES // (lanes * itemsize)) // sublanes * sublanes)

    padded = ((n + chunk - 1) // chunk) * chunk
    if padded != n:
        # Padding is unavoidable for this n; pad all the way to a block
        # multiple so no grid step is a partial / masked edge block.
        block_elems = br * lanes
        if padded > block_elems:
            padded = ((n + block_elems - 1) // block_elems) * block_elems
    rows = padded // lanes
    br = min(br, rows)

    if padded == n:
        x2 = x.reshape(rows, lanes)          # zero-copy path for aligned n
    else:
        # TODO(synk): this pad and the final slice each cost one extra HBM pass
        # for non-aligned n; removable via allow_input_fusion or an in-kernel
        # masked tail store, kept explicit here for robustness.
        x2 = jnp.zeros((padded,), dtype=x.dtype).at[:n].set(x).reshape(rows, lanes)

    grid = (pl.cdiv(rows, br),)

    y2 = pl.pallas_call(
        functools.partial(polyfit_kernel, ncoef=ncoef),
        out_shape=jax.ShapeDtypeStruct((rows, lanes), x.dtype),
        grid_spec=pltpu.PrefetchScalarGridSpec(
            num_scalar_prefetch=1,                      # W -> SMEM once, before the grid
            grid=grid,
            in_specs=[pl.BlockSpec((br, lanes), lambda i, w: (i, 0))],
            out_specs=pl.BlockSpec((br, lanes), lambda i, w: (i, 0)),
        ),
        compiler_params=pltpu.CompilerParams(
            # Independent tiles; shards across both TensorCores on v7x.
            # TODO(synk): verify dual-TC in xprof on v7x; switch this axis to
            # pltpu.CORE_PARALLEL if it runs single-core.
            dimension_semantics=("parallel",),
            vmem_limit_bytes=_VMEM_LIMIT_BYTES,
        ),
        cost_estimate=pl.CostEstimate(
            flops=2 * max(ncoef - 1, 1) * padded,
            transcendentals=0,
            bytes_accessed=2 * padded * itemsize,
        ),
    )(w, x2)

    out = y2.reshape(-1)
    return out[:n] if padded != n else out


if __name__ == "__main__":
    degree = 4
    n = 100  # mirrors `x = torch.linspace(0, 1, 100)` in the lecture script

    x = jnp.linspace(0.0, 1.0, n, dtype=jnp.float32)
    # The PyTorch module initializes W to zeros (trivial output); use
    # deterministic nonzero coefficients from PRNGKey(0) so the check is real.
    w = jax.random.normal(jax.random.PRNGKey(0), (degree,), dtype=jnp.float32)

    y = jax.block_until_ready(polyfit(x, w))

    # Pure-JAX reference of the PyTorch forward loop.
    y_ref = jnp.zeros_like(x)
    for i in range(degree):
        y_ref = y_ref + w[i] * x ** i

    assert y.shape == x.shape and y.dtype == x.dtype
    assert jnp.allclose(y, y_ref, atol=1e-5, rtol=1e-5)
    print("KERNEL_OK")
</pallas_src>

<mosaic_0001>
module attributes {stable_mosaic.version = 11 : i64} {
  func.func @polyfit_kernel(%arg0: i32, %arg1: memref<4xf32, #tpu.memory_space<smem>>, %arg2: memref<8x128xf32, #tpu.memory_space<vmem>>, %arg3: memref<8x128xf32, #tpu.memory_space<vmem>>) attributes {dimension_semantics = [#tpu.dimension_semantics<parallel>], iteration_bounds = array<i64: 1>, scalar_prefetch = 1 : i64, scratch_operands = 0 : i64, tpu.core_type = #tpu.core_type<tc>, window_params = [{transform_indices = @transform_0, window_bounds = array<i64: 8, 128>}, {transform_indices = @transform_1, window_bounds = array<i64: 8, 128>}]} {
    %c0 = arith.constant 0 : index
    %c0_0 = arith.constant 0 : index
    %0 = vector.load %arg2[%c0, %c0_0] : memref<8x128xf32, #tpu.memory_space<vmem>>, vector<8x128xf32>
    %c3 = arith.constant 3 : index
    %1 = memref.load %arg1[%c3] : memref<4xf32, #tpu.memory_space<smem>>
    %2 = vector.broadcast %1 : f32 to vector<8x128xf32>
    %3 = arith.mulf %0, %2 : vector<8x128xf32>
    %c2 = arith.constant 2 : index
    %4 = memref.load %arg1[%c2] : memref<4xf32, #tpu.memory_space<smem>>
    %5 = vector.broadcast %4 : f32 to vector<8x128xf32>
    %6 = arith.addf %3, %5 : vector<8x128xf32>
    %7 = arith.mulf %6, %0 : vector<8x128xf32>
    %c1 = arith.constant 1 : index
    %8 = memref.load %arg1[%c1] : memref<4xf32, #tpu.memory_space<smem>>
    %9 = vector.broadcast %8 : f32 to vector<8x128xf32>
    %10 = arith.addf %7, %9 : vector<8x128xf32>
    %11 = arith.mulf %10, %0 : vector<8x128xf32>
    %c0_1 = arith.constant 0 : index
    %12 = memref.load %arg1[%c0_1] : memref<4xf32, #tpu.memory_space<smem>>
    %13 = vector.broadcast %12 : f32 to vector<8x128xf32>
    %14 = arith.addf %11, %13 : vector<8x128xf32>
    %c0_2 = arith.constant 0 : index
    %c0_3 = arith.constant 0 : index
    %15 = vector.load %arg3[%c0_2, %c0_3] : memref<8x128xf32, #tpu.memory_space<vmem>>, vector<8x128xf32>
    tpu.vector_store %arg3[%c0_2, %c0_3], %14 {strides = array<i32>} : memref<8x128xf32, #tpu.memory_space<vmem>>, vector<8x128xf32>,
    return
  }
  func.func @transform_0(%arg0: i32, %arg1: memref<4xf32, #tpu.memory_space<smem>>) -> (i32, i32) {
    %c0_i32 = arith.constant 0 : i32
    %c0_i32_0 = arith.constant 0 : i32
    return %arg0, %c0_i32 : i32, i32
  }
  func.func @transform_1(%arg0: i32, %arg1: memref<4xf32, #tpu.memory_space<smem>>) -> (i32, i32) {
    %c0_i32 = arith.constant 0 : i32
    %c0_i32_0 = arith.constant 0 : i32
    return %arg0, %c0_i32 : i32, i32
  }
}

</mosaic_0001>

<llo_original>
// kernel: tpu_custom_call.1
$region0: #{tpu_custom_call.1}
  #allocation0 [shape = 'u32[]', space=smem, size = 0x4, offset = 0x4, fixed_abs, tag = 'smem constant byte address 0x4 - core index']
  #allocation1 [shape = 'u32[144,128]{1,0:T(1,128)}', space=vmem, size = 0x12000, scoped, tag = 'internal scratch']
  #allocation2 [shape = 's32[1]{0}', space=sflag, size = 0x4, scoped, tag = 'scoped memory for tpu_custom_call.1']
  #allocation3 [shape = 'u8[512]{0}', space=smem, size = 0x200, scoped, tag = 'prefetched SMEM operand 0']
  %s0 = inlined_call_operand.hbm [shape: f32[4], index: 0, kind: input, shape index: {}]
  %s1 = inlined_call_operand.hbm [shape: f32[8,128], index: 1, kind: input, shape index: {}]
  %s2 = inlined_call_operand.hbm [shape: f32[8,128], index: 2, kind: output, shape index: {}]
  %s3 = sld [smem:[#allocation0]]
  $region18: #{tpu_custom_call.1} parent=0
    _
  %s5 = ssub.s32 1, %s3
  %s6 = scalar_select 0, %s5, %s3
  %8 = dma.hbm_to_smem %s0, 16, [#allocation3], [#allocation2]
  %9 = dma.done [#allocation2], 16
  %10 = sfence
  $region1: #{tpu_custom_call.1} parent=0
    #allocation4 [shape = 'u8[4096]{0}', space=vmem, size = 0x1000, scoped, tag = 'input window, operand 1, single buffered']
    #allocation5 [shape = 's32[1]{0}', space=sflag, size = 0x4, scoped, tag = 'scoped memory for tpu_custom_call.1']
    #allocation6 [shape = 's32[1]{0}', space=sflag, size = 0x4, scoped, tag = 'scoped memory for tpu_custom_call.1']
    #allocation7 [shape = 'u8[4096]{0}', space=vmem, size = 0x1000, scoped, tag = 'output window, operand 0, single buffered']
    %11 = vsyncpa [#allocation5], 0
    %12 = vsyncpa [#allocation6], 0
    // Predicated region
    $region2: #{tpu_custom_call.1} parent=1 // pred_check
      _
    $region3: #{tpu_custom_call.1} parent=1 // pred_check_branch
      %14 = sbr.rel (0) target = $region5
    $region4: #{tpu_custom_call.1} parent=1 // pred_region
      %s16 = ssub.s32 128, 128
      %17 = vsyncadd [#allocation5], %s16
      %s19 = sshll.u32 [#allocation4], 4
      %s20 = int_to_ptr.vmem [resolvable:$true] %s19
      %22 = dma.hbm_to_vmem [thread:$0]  %s1, 128, %s20, [#allocation5]
    $region5: #{tpu_custom_call.1} parent=1 // pred_fallthru
      _
    // Predicated region
    $region6: #{tpu_custom_call.1} parent=1 // pred_check
      _
    $region7: #{tpu_custom_call.1} parent=1 // pred_check_branch
      %24 = sbr.rel (0) target = $region9
    $region8: #{tpu_custom_call.1} parent=1 // pred_region
      %25 = dma.done [#allocation5], 128
    $region9: #{tpu_custom_call.1} parent=1 // pred_fallthru
      _
    %v26 = vld [vmem:[#allocation4] sm:$0xff]
    %s27 = sld [smem:[#allocation3 + $0x3]]
    %v28 = vstv %s27
    %v29 = vmul.f32 %v26, %v28
    %s30 = sld [smem:[#allocation3 + $0x2]]
    %v31 = vstv %s30
    %v32 = vadd.f32 %v29, %v31
    %v33 = vmul.f32 %v32, %v26
    %s34 = sld [smem:[#allocation3 + $0x1]]
    %v35 = vstv %s34
    %v36 = vadd.f32 %v33, %v35
    %v37 = vmul.f32 %v36, %v26
    %s38 = sld [smem:[#allocation3]]
    %v39 = vstv %s38
    %v40 = vadd.f32 %v37, %v39
    %41 = vst [vmem:[#allocation7] sm:$0xff] %v40
    // Predicated region
    $region10: #{tpu_custom_call.1} parent=1 // pred_check
      _
    $region11: #{tpu_custom_call.1} parent=1 // pred_check_branch
      %43 = sbr.rel (0) target = $region13
    $region12: #{tpu_custom_call.1} parent=1 // pred_region
      %s45 = ssub.s32 128, 128
      %46 = vsyncadd [#allocation6], %s45
      %s48 = sshll.u32 [#allocation7], 4
      %s49 = int_to_ptr.vmem [resolvable:$true] %s48
      %51 = dma.vmem_to_hbm [thread:$0]  %s49, 128, %s2, [#allocation6]
    $region13: #{tpu_custom_call.1} parent=1 // pred_fallthru
      _
    // Predicated region
    $region14: #{tpu_custom_call.1} parent=1 // pred_check
      _
    $region15: #{tpu_custom_call.1} parent=1 // pred_check_branch
      %53 = sbr.rel (0) target = $region17
    $region16: #{tpu_custom_call.1} parent=1 // pred_region
      %54 = dma.done [#allocation6], 128
    $region17: #{tpu_custom_call.1} parent=1 // pred_fallthru
      _
    %55 = vsyncpa [#allocation5], 1
    %56 = vsyncpa [#allocation6], 1

</llo_original>
